<compile_context>
chip_gen: v7x
topology: tpu7x:2x2x1
jax: 0.10.0
libtpu: 0.0.40
codegen_flags: <defaults>
</compile_context>

<pallas_src>
import functools

import jax
import jax.numpy as jnp
from jax.experimental import pallas as pl
from jax.experimental.pallas import tpu as pltpu


def _ls_ce_kernel(logits_ref, targets_ref, loss_sum_ref, count_ref, *,
                  num_classes, total_rows, block_rows,
                  lb_pos, lb_neg, ignore_index):
    pid = pl.program_id(0)

    @pl.when(pid == 0)
    def _init():
        loss_sum_ref[...] = jnp.zeros_like(loss_sum_ref)
        count_ref[...] = jnp.zeros_like(count_ref)

    x = logits_ref[...].astype(jnp.float32)          # (TB, C)
    t = targets_ref[...]                             # (TB, 1) int32

    # Validity mask: rows past the true M (last partial tile) and ignore_index
    # rows contribute neither loss nor count.
    row_ids = (jax.lax.broadcasted_iota(jnp.int32, (block_rows, 1), 0)
               + pid * block_rows)
    valid = jnp.logical_and(row_ids < total_rows, t != ignore_index)  # (TB, 1)

    # Numerically-stable shifted log-softmax pieces; reuse xs = x - m.
    m = jnp.max(x, axis=-1, keepdims=True)                            # (TB, 1)
    xs = x - m                                                        # (TB, C)
    lse = jnp.log(jnp.sum(jnp.exp(xs), axis=-1, keepdims=True))       # (TB, 1)

    cls_ids = jax.lax.broadcasted_iota(jnp.int32, (block_rows, num_classes), 1)
    onehot = (cls_ids == t).astype(jnp.float32)                       # (TB, C)
    picked_s = jnp.sum(xs * onehot, axis=-1, keepdims=True)           # logp[t] + lse
    sum_xs = jnp.sum(xs, axis=-1, keepdims=True)                      # sum logp + C*lse

    logp_t = picked_s - lse
    sum_logp = sum_xs - lse * jnp.float32(num_classes)
    # -(lb_pos*logp_t + lb_neg*(sum_logp - logp_t))
    loss = -((lb_pos - lb_neg) * logp_t + lb_neg * sum_logp)          # (TB, 1)

    vmask = valid.astype(jnp.float32)
    loss_sum_ref[...] += jnp.sum(jnp.where(valid, loss, 0.0), keepdims=True)
    count_ref[...] += jnp.sum(vmask, keepdims=True)


def _choose_block_rows(num_rows, num_classes, itemsize):
    # Target ~2 MiB per logits tile; with double buffering this stays well
    # within the default scoped VMEM limit on v5e / v6e / v7x.
    target_bytes = 2 * 1024 * 1024
    tb = target_bytes // max(num_classes * itemsize, 1)
    tb = max(8, min(int(tb), 1024))
    tb = (tb // 8) * 8
    rows_padded = ((num_rows + 7) // 8) * 8
    return max(8, min(tb, rows_padded))


def label_smooth_softmax_ce(logits, label, label_smooth=0.1, reduction="mean",
                            ignore_index=-100, block_rows=None):
    """Pallas TPU equivalent of LabelSmoothSoftmaxCEV1.forward.

    logits: (N, C, H, W) float (f32 or bf16 — kept as-is in HBM, upcast in-kernel)
    label:  (N, H, W) int class indices; ignore_index marks ignored pixels.
    """
    if reduction not in ("mean", "sum"):
        # TODO(synk): reduction='none' (per-pixel loss map output) not implemented.
        raise NotImplementedError("only 'mean' and 'sum' reductions are supported")

    N, C, H, W = logits.shape
    M = N * H * W

    # Channels-last: class dim on lanes, pixels on sublanes.
    x2d = jnp.transpose(logits, (0, 2, 3, 1)).reshape(M, C)
    t2d = label.astype(jnp.int32).reshape(M, 1)

    itemsize = jnp.dtype(x2d.dtype).itemsize
    tb = block_rows if block_rows is not None else _choose_block_rows(M, C, itemsize)
    grid = (pl.cdiv(M, tb),)

    lb_pos = 1.0 - label_smooth
    lb_neg = label_smooth / C

    kernel = functools.partial(
        _ls_ce_kernel,
        num_classes=C, total_rows=M, block_rows=tb,
        lb_pos=lb_pos, lb_neg=lb_neg, ignore_index=ignore_index)

    loss_sum, count = pl.pallas_call(
        kernel,
        out_shape=(jax.ShapeDtypeStruct((1, 1), jnp.float32),
                   jax.ShapeDtypeStruct((1, 1), jnp.float32)),
        grid=grid,
        in_specs=[
            pl.BlockSpec((tb, C), lambda i: (i, 0)),   # logits tile
            pl.BlockSpec((tb, 1), lambda i: (i, 0)),   # target tile
        ],
        out_specs=(
            pl.BlockSpec((1, 1), lambda i: (0, 0)),    # running loss sum
            pl.BlockSpec((1, 1), lambda i: (0, 0)),    # running valid count
        ),
        compiler_params=pltpu.CompilerParams(
            dimension_semantics=("arbitrary",)),       # accumulator axis
        cost_estimate=pl.CostEstimate(
            flops=int(8 * M * C),
            transcendentals=int(M * C + M),
            bytes_accessed=int(M * C * itemsize + M * 4 + 8)),
    )(x2d, t2d)

    loss_sum = loss_sum[0, 0]
    n_valid = count[0, 0]
    if reduction == "sum":
        return loss_sum
    return loss_sum / n_valid


def _reference_loss(logits, label, label_smooth=0.1, ignore_index=-100):
    """Pure-JAX reference of LabelSmoothSoftmaxCEV1 (mean reduction)."""
    N, C, H, W = logits.shape
    ignore = label == ignore_index
    n_valid = jnp.sum(jnp.logical_not(ignore)).astype(jnp.float32)
    lbl = jnp.where(ignore, 0, label)
    lb_pos, lb_neg = 1.0 - label_smooth, label_smooth / C
    logp = jax.nn.log_softmax(logits.astype(jnp.float32), axis=1)   # (N,C,H,W)
    onehot = jax.nn.one_hot(lbl, C, axis=1, dtype=jnp.float32)      # (N,C,H,W)
    smoothed = jnp.where(onehot > 0.5, lb_pos, lb_neg)
    loss = -jnp.sum(logp * smoothed, axis=1)                        # (N,H,W)
    loss = jnp.where(ignore, 0.0, loss)
    return jnp.sum(loss) / n_valid


if __name__ == "__main__":
    key = jax.random.PRNGKey(0)
    k1, k2, k3 = jax.random.split(key, 3)

    N, C, H, W = 2, 32, 16, 16            # M = N*H*W = 512 pixels
    logits = jax.random.normal(k1, (N, C, H, W), dtype=jnp.float32)
    label = jax.random.randint(k2, (N, H, W), 0, C, dtype=jnp.int32)
    # sprinkle some ignored pixels to exercise the ignore_index path
    ignore_mask = jax.random.uniform(k3, (N, H, W)) < 0.1
    label = jnp.where(ignore_mask, -100, label)

    # block_rows=120 -> 5 grid steps with a partial last tile: exercises the
    # multi-step accumulator and the row-validity masking paths.
    loss = label_smooth_softmax_ce(logits, label, block_rows=120)
    loss = jax.block_until_ready(loss)

    ref = _reference_loss(logits, label)
    assert loss.shape == ()
    assert bool(jnp.isfinite(loss))
    assert jnp.allclose(loss, ref, rtol=1e-5, atol=1e-5), (loss, ref)

    print("KERNEL_OK")
</pallas_src>

<mosaic_0001>
module attributes {stable_mosaic.version = 11 : i64} {
  func.func @_ls_ce_kernel(%arg0: i32, %arg1: memref<120x32xf32, #tpu.memory_space<vmem>>, %arg2: memref<120x1xi32, #tpu.memory_space<vmem>>, %arg3: memref<1x1xf32, #tpu.memory_space<vmem>>, %arg4: memref<1x1xf32, #tpu.memory_space<vmem>>) attributes {dimension_semantics = [#tpu.dimension_semantics<arbitrary>], iteration_bounds = array<i64: 5>, scalar_prefetch = 0 : i64, scratch_operands = 0 : i64, tpu.core_type = #tpu.core_type<tc>, window_params = [{transform_indices = @transform_0, window_bounds = array<i64: 120, 32>}, {transform_indices = @transform_1, window_bounds = array<i64: 120, 1>}, {pipeline_mode = #tpu.pipeline_mode<synchronous>, transform_indices = @transform_2, window_bounds = array<i64: 1, 1>}, {pipeline_mode = #tpu.pipeline_mode<synchronous>, transform_indices = @transform_3, window_bounds = array<i64: 1, 1>}]} {
    %c0_i32 = arith.constant 0 : i32
    %0 = arith.cmpi eq, %arg0, %c0_i32 : i32
    %1 = arith.extui %0 : i1 to i32
    %c0_i32_0 = arith.constant 0 : i32
    %2 = arith.cmpi ne, %1, %c0_i32_0 : i32
    scf.if %2 {
      %cst_22 = arith.constant 0.000000e+00 : f32
      %63 = vector.broadcast %cst_22 : f32 to vector<1x1xf32>
      %c0_23 = arith.constant 0 : index
      %c0_24 = arith.constant 0 : index
      %64 = vector.load %arg3[%c0_23, %c0_24] : memref<1x1xf32, #tpu.memory_space<vmem>>, vector<1x1xf32>
      tpu.vector_store %arg3[%c0_23, %c0_24], %63 {strides = array<i32>} : memref<1x1xf32, #tpu.memory_space<vmem>>, vector<1x1xf32>,
      %cst_25 = arith.constant 0.000000e+00 : f32
      %65 = vector.broadcast %cst_25 : f32 to vector<1x1xf32>
      %c0_26 = arith.constant 0 : index
      %c0_27 = arith.constant 0 : index
      %66 = vector.load %arg4[%c0_26, %c0_27] : memref<1x1xf32, #tpu.memory_space<vmem>>, vector<1x1xf32>
      tpu.vector_store %arg4[%c0_26, %c0_27], %65 {strides = array<i32>} : memref<1x1xf32, #tpu.memory_space<vmem>>, vector<1x1xf32>,
    } else {
    }
    %c0 = arith.constant 0 : index
    %c0_1 = arith.constant 0 : index
    %3 = vector.load %arg1[%c0, %c0_1] : memref<120x32xf32, #tpu.memory_space<vmem>>, vector<120x32xf32>
    %c0_2 = arith.constant 0 : index
    %c0_3 = arith.constant 0 : index
    %4 = vector.load %arg2[%c0_2, %c0_3] : memref<120x1xi32, #tpu.memory_space<vmem>>, vector<120x1xi32>
    %5 = tpu.iota {dimensions = array<i32: 0>} : vector<120x1xi32>
    %c120_i32 = arith.constant 120 : i32
    %6 = arith.muli %arg0, %c120_i32 : i32
    %7 = vector.broadcast %6 : i32 to vector<120x1xi32>
    %8 = arith.addi %5, %7 : vector<120x1xi32>
    %c512_i32 = arith.constant 512 : i32
    %9 = vector.broadcast %c512_i32 : i32 to vector<120x1xi32>
    %10 = arith.cmpi slt, %8, %9 : vector<120x1xi32>
    %c-100_i32 = arith.constant -100 : i32
    %11 = vector.broadcast %c-100_i32 : i32 to vector<120x1xi32>
    %12 = arith.cmpi ne, %4, %11 : vector<120x1xi32>
    %13 = arith.andi %10, %12 : vector<120x1xi1>
    %cst = arith.constant dense<0xFF800000> : vector<120xf32>
    %14 = vector.multi_reduction <maximumf>, %3, %cst [1] : vector<120x32xf32> to vector<120xf32>
    %15 = vector.shape_cast %14 : vector<120xf32> to vector<120x1xf32>
    %16 = vector.broadcast %15 : vector<120x1xf32> to vector<120x32xf32>
    %17 = arith.subf %3, %16 : vector<120x32xf32>
    %18 = math.exp %17 : vector<120x32xf32>
    %cst_4 = arith.constant dense<0.000000e+00> : vector<120xf32>
    %19 = vector.multi_reduction <add>, %18, %cst_4 [1] : vector<120x32xf32> to vector<120xf32>
    %20 = vector.shape_cast %19 : vector<120xf32> to vector<120x1xf32>
    %21 = math.log %20 : vector<120x1xf32>
    %22 = tpu.iota {dimensions = array<i32: 1>} : vector<120x32xi32>
    %23 = vector.broadcast %4 : vector<120x1xi32> to vector<120x32xi32>
    %24 = arith.cmpi eq, %22, %23 : vector<120x32xi32>
    %25 = arith.extui %24 : vector<120x32xi1> to vector<120x32xi32>
    %26 = arith.sitofp %25 : vector<120x32xi32> to vector<120x32xf32>
    %27 = arith.mulf %17, %26 : vector<120x32xf32>
    %cst_5 = arith.constant dense<0.000000e+00> : vector<120xf32>
    %28 = vector.multi_reduction <add>, %27, %cst_5 [1] : vector<120x32xf32> to vector<120xf32>
    %29 = vector.shape_cast %28 : vector<120xf32> to vector<120x1xf32>
    %cst_6 = arith.constant dense<0.000000e+00> : vector<120xf32>
    %30 = vector.multi_reduction <add>, %17, %cst_6 [1] : vector<120x32xf32> to vector<120xf32>
    %31 = vector.shape_cast %30 : vector<120xf32> to vector<120x1xf32>
    %32 = arith.subf %29, %21 : vector<120x1xf32>
    %cst_7 = arith.constant 3.200000e+01 : f32
    %33 = vector.broadcast %cst_7 : f32 to vector<120x1xf32>
    %34 = arith.mulf %21, %33 : vector<120x1xf32>
    %35 = arith.subf %31, %34 : vector<120x1xf32>
    %cst_8 = arith.constant 8.968750e-01 : f32
    %36 = vector.broadcast %cst_8 : f32 to vector<120x1xf32>
    %37 = arith.mulf %36, %32 : vector<120x1xf32>
    %cst_9 = arith.constant 3.125000e-03 : f32
    %38 = vector.broadcast %cst_9 : f32 to vector<120x1xf32>
    %39 = arith.mulf %38, %35 : vector<120x1xf32>
    %40 = arith.addf %37, %39 : vector<120x1xf32>
    %cst_10 = arith.constant 0.000000e+00 : f32
    %41 = vector.broadcast %cst_10 : f32 to vector<120x1xf32>
    %42 = arith.subf %41, %40 : vector<120x1xf32>
    %43 = arith.extui %13 : vector<120x1xi1> to vector<120x1xi32>
    %44 = arith.sitofp %43 : vector<120x1xi32> to vector<120x1xf32>
    %c0_11 = arith.constant 0 : index
    %c0_12 = arith.constant 0 : index
    %45 = vector.load %arg3[%c0_11, %c0_12] : memref<1x1xf32, #tpu.memory_space<vmem>>, vector<1x1xf32>
    %cst_13 = arith.constant 0.000000e+00 : f32
    %46 = vector.broadcast %cst_13 : f32 to vector<120x1xf32>
    %47 = arith.select %13, %42, %46 : vector<120x1xi1>, vector<120x1xf32>
    %48 = vector.shape_cast %47 : vector<120x1xf32> to vector<1x120x1xf32>
    %cst_14 = arith.constant dense<0.000000e+00> : vector<1xf32>
    %49 = vector.multi_reduction <add>, %48, %cst_14 [1, 2] : vector<1x120x1xf32> to vector<1xf32>
    %50 = vector.shape_cast %49 : vector<1xf32> to vector<1x1x1xf32>
    %51 = vector.extract %50[0, 0, 0] : f32 from vector<1x1x1xf32>
    %52 = vector.broadcast %51 : f32 to vector<1x1xf32>
    %53 = arith.addf %45, %52 : vector<1x1xf32>
    %c0_15 = arith.constant 0 : index
    %c0_16 = arith.constant 0 : index
    %54 = vector.load %arg3[%c0_15, %c0_16] : memref<1x1xf32, #tpu.memory_space<vmem>>, vector<1x1xf32>
    tpu.vector_store %arg3[%c0_15, %c0_16], %53 {strides = array<i32>} : memref<1x1xf32, #tpu.memory_space<vmem>>, vector<1x1xf32>,
    %c0_17 = arith.constant 0 : index
    %c0_18 = arith.constant 0 : index
    %55 = vector.load %arg4[%c0_17, %c0_18] : memref<1x1xf32, #tpu.memory_space<vmem>>, vector<1x1xf32>
    %56 = vector.shape_cast %44 : vector<120x1xf32> to vector<1x120x1xf32>
    %cst_19 = arith.constant dense<0.000000e+00> : vector<1xf32>
    %57 = vector.multi_reduction <add>, %56, %cst_19 [1, 2] : vector<1x120x1xf32> to vector<1xf32>
    %58 = vector.shape_cast %57 : vector<1xf32> to vector<1x1x1xf32>
    %59 = vector.extract %58[0, 0, 0] : f32 from vector<1x1x1xf32>
    %60 = vector.broadcast %59 : f32 to vector<1x1xf32>
    %61 = arith.addf %55, %60 : vector<1x1xf32>
    %c0_20 = arith.constant 0 : index
    %c0_21 = arith.constant 0 : index
    %62 = vector.load %arg4[%c0_20, %c0_21] : memref<1x1xf32, #tpu.memory_space<vmem>>, vector<1x1xf32>
    tpu.vector_store %arg4[%c0_20, %c0_21], %61 {strides = array<i32>} : memref<1x1xf32, #tpu.memory_space<vmem>>, vector<1x1xf32>,
    return
  }
  func.func @transform_0(%arg0: i32) -> (i32, i32) {
    %c0_i32 = arith.constant 0 : i32
    %c0_i32_0 = arith.constant 0 : i32
    return %arg0, %c0_i32 : i32, i32
  }
  func.func @transform_1(%arg0: i32) -> (i32, i32) {
    %c0_i32 = arith.constant 0 : i32
    %c0_i32_0 = arith.constant 0 : i32
    return %arg0, %c0_i32 : i32, i32
  }
  func.func @transform_2(%arg0: i32) -> (i32, i32) {
    %c0_i32 = arith.constant 0 : i32
    %c0_i32_0 = arith.constant 0 : i32
    %c0_i32_1 = arith.constant 0 : i32
    return %c0_i32, %c0_i32_0 : i32, i32
  }
  func.func @transform_3(%arg0: i32) -> (i32, i32) {
    %c0_i32 = arith.constant 0 : i32
    %c0_i32_0 = arith.constant 0 : i32
    %c0_i32_1 = arith.constant 0 : i32
    return %c0_i32, %c0_i32_0 : i32, i32
  }
}

</mosaic_0001>

<llo_original>
// kernel: tpu_custom_call.1
$region0: #{tpu_custom_call.1}
  #allocation0 [shape = 'u32[]', space=smem, size = 0x4, offset = 0x4, fixed_abs, tag = 'smem constant byte address 0x4 - core index']
  #allocation1 [shape = 'u32[144,128]{1,0:T(1,128)}', space=vmem, size = 0x12000, scoped, tag = 'internal scratch']
  %s0 = inlined_call_operand.vmem [shape: f32[512,32], index: 0, kind: input, shape index: {}]
  %s1 = inlined_call_operand.vmem [shape: s32[512,1], index: 1, kind: input, shape index: {}]
  %s2 = inlined_call_operand.hbm [shape: f32[1,1], index: 2, kind: output, shape index: {0}]
  %s3 = inlined_call_operand.hbm [shape: f32[1,1], index: 3, kind: output, shape index: {1}]
  %4 = xla_tuple %s2, %s3
  %s5 = sld [smem:[#allocation0]]
  $region53: #{tpu_custom_call.1} parent=0
    _
  %s7 = ssub.s32 1, %s5
  %s8 = scalar_select 0, %s7, %s5
  $region1: #{tpu_custom_call.1} parent=0
    #allocation2 [shape = 'u8[512]{0}', space=vmem, size = 0x400, scoped, tag = 'output window, operand 0, single buffered']
    #allocation3 [shape = 's32[2]{0}', space=sflag, size = 0x8, scoped, tag = 'scoped memory for tpu_custom_call.1']
    #allocation4 [shape = 'u8[512]{0}', space=vmem, size = 0x400, scoped, tag = 'output window, operand 1, single buffered']
    #allocation5 [shape = 's32[1]{0}', space=sflag, size = 0x4, scoped, tag = 'scoped memory for tpu_custom_call.1']
    %9 = vsyncpa [#allocation3], 0
    %10 = vsyncpa [#allocation5], 0
    loop: start=0, step=1, limit=7
    $region2: #{tpu_custom_call.1} parent=1 // loop_pre_header
      _
    $region3: #{tpu_custom_call.1} parent=1 // loop_header
      %s12 = sphi 0, %s16
      %p13 = scmp.ge.s32.totalorder %s12, 7
      %s22 = sphi 0, %s24
      %s25 = sphi 0, %s22
      %s26 = sphi 0, %s25
      %s42 = sphi 0, %s26
      %s48 = sphi 0, %s50
      %s51 = sphi 0, %s48
      %s52 = sphi 0, %s51
      %s68 = sphi 0, %s52
      %s72 = sphi 0, %s72
      %s74 = sphi 0, %s72
      %s75 = sphi 0, %s74
      %s89 = sphi 0, %s75
      %s93 = sphi 0, %s93
      %s95 = sphi 0, %s93
      %s96 = sphi 0, %s95
      %s110 = sphi 0, %s96
    $region4: #{tpu_custom_call.1} parent=1 // loop_header_branch
      %15 = sbr.rel (%p13) target = $region8
    $region5: #{tpu_custom_call.1} parent=1 // loop_body
      %s17 = ssub.s32 %s12, 1
      %s18 = ssub.s32 %s12, 2
      %s19 = sadd.s32 %s12, 1
      %s20 = ssub.s32 %s12, %s19
      %p21 = scmp.eq.s32.totalorder %s20, 0
      %s23 = sadd.s32 %s22, 1
      %s24 = scalar_select %p21, %s22, %s23
      %p27 = pneg %p21
      %p28 = scmp.eq.s32.totalorder %s12, 4
      %p29 = por %p27, %p28
      %p30 = scmp.ne.s32.totalorder %s22, %s25
      %p31 = scmp.eq.s32.totalorder %s12, 0
      %p32 = por %p30, %p31
      %p33 = scmp.ne.s32.totalorder %s22, %s25
      %p34 = scmp.eq.s32.totalorder %s17, 4
      %p35 = por %p33, %p34
      %p36 = scmp.ne.s32.totalorder %s25, %s26
      %p37 = scmp.eq.s32.totalorder %s17, 0
      %p38 = por %p36, %p37
      %p39 = scmp.ne.s32.totalorder %s25, %s26
      %p40 = scmp.eq.s32.totalorder %s18, 4
      %p41 = por %p39, %p40
      %p43 = scmp.ne.s32.totalorder %s26, %s42
      %p44 = scmp.eq.s32.totalorder %s18, 0
      %p45 = por %p43, %p44
      %s46 = ssub.s32 %s12, %s19
      %p47 = scmp.eq.s32.totalorder %s46, 0
      %s49 = sadd.s32 %s48, 1
      %s50 = scalar_select %p47, %s48, %s49
      %p53 = pneg %p47
      %p54 = scmp.eq.s32.totalorder %s12, 4
      %p55 = por %p53, %p54
      %p56 = scmp.ne.s32.totalorder %s48, %s51
      %p57 = scmp.eq.s32.totalorder %s12, 0
      %p58 = por %p56, %p57
      %p59 = scmp.ne.s32.totalorder %s48, %s51
      %p60 = scmp.eq.s32.totalorder %s17, 4
      %p61 = por %p59, %p60
      %p62 = scmp.ne.s32.totalorder %s51, %s52
      %p63 = scmp.eq.s32.totalorder %s17, 0
      %p64 = por %p62, %p63
      %p65 = scmp.ne.s32.totalorder %s51, %s52
      %p66 = scmp.eq.s32.totalorder %s18, 4
      %p67 = por %p65, %p66
      %p69 = scmp.ne.s32.totalorder %s52, %s68
      %p70 = scmp.eq.s32.totalorder %s18, 0
      %p71 = por %p69, %p70
      %s73 = sadd.s32 %s72, 1
      %p76 = scmp.eq.s32.totalorder %s12, 4
      %p77 = scmp.ne.s32.totalorder %s72, %s74
      %p78 = scmp.eq.s32.totalorder %s12, 0
      %p79 = por %p77, %p78
      %p80 = scmp.ne.s32.totalorder %s72, %s74
      %p81 = scmp.eq.s32.totalorder %s17, 4
      %p82 = por %p80, %p81
      %p83 = scmp.ne.s32.totalorder %s74, %s75
      %p84 = scmp.eq.s32.totalorder %s17, 0
      %p85 = por %p83, %p84
      %p86 = scmp.ne.s32.totalorder %s74, %s75
      %p87 = scmp.eq.s32.totalorder %s18, 4
      %p88 = por %p86, %p87
      %p90 = scmp.ne.s32.totalorder %s75, %s89
      %p91 = scmp.eq.s32.totalorder %s18, 0
      %p92 = por %p90, %p91
      %s94 = sadd.s32 %s93, 1
      %p97 = scmp.eq.s32.totalorder %s12, 4
      %p98 = scmp.ne.s32.totalorder %s93, %s95
      %p99 = scmp.eq.s32.totalorder %s12, 0
      %p100 = por %p98, %p99
      %p101 = scmp.ne.s32.totalorder %s93, %s95
      %p102 = scmp.eq.s32.totalorder %s17, 4
      %p103 = por %p101, %p102
      %p104 = scmp.ne.s32.totalorder %s95, %s96
      %p105 = scmp.eq.s32.totalorder %s17, 0
      %p106 = por %p104, %p105
      %p107 = scmp.ne.s32.totalorder %s95, %s96
      %p108 = scmp.eq.s32.totalorder %s18, 4
      %p109 = por %p107, %p108
      %p111 = scmp.ne.s32.totalorder %s96, %s110
      %p112 = scmp.eq.s32.totalorder %s18, 0
      %p113 = por %p111, %p112
      %p114 = scmp.le.s32.totalorder 1, %s12
      %p115 = scmp.lt.s32.totalorder %s12, 6
      %p116 = pnand %p114, %p115
      %p117 = pneg %p116
      // Predicated region
      $region9: #{tpu_custom_call.1} parent=5 // pred_check
        _
      $region10: #{tpu_custom_call.1} parent=5 // pred_check_branch
        %119 = sbr.rel (%p116) target = $region12
      $region11: #{tpu_custom_call.1} parent=5 // pred_region
        %s120 = ssub.s32 %s12, 1
      $region12: #{tpu_custom_call.1} parent=5 // pred_fallthru
        _
      %p121 = scmp.lt.s32.totalorder %s12, 5
      // Predicated region
      $region13: #{tpu_custom_call.1} parent=5 // pred_check
        %p122 = pneg %p121
      $region14: #{tpu_custom_call.1} parent=5 // pred_check_branch
        %124 = sbr.rel (%p122) target = $region16
      $region15: #{tpu_custom_call.1} parent=5 // pred_region
        // Predicated region
        $region17: #{tpu_custom_call.1} parent=15 // pred_check
          %p125 = pneg %p32
        $region18: #{tpu_custom_call.1} parent=15 // pred_check_branch
          %127 = sbr.rel (%p125) target = $region20
        $region19: #{tpu_custom_call.1} parent=15 // pred_region
          %s128 = smul.u32 15, %s12
          %s129 = ssub.s32 64, %s128
          %p130 = scmp.lt.s32.totalorder %s129, 15
          %s131 = scalar_select %p130, %s129, 15
          %s132 = smul.u32 128, %s131
          %p133 = scmp.lt.s32.totalorder %s128, 63
          %s134 = scalar_select %p133, %s128, 63
          %s135 = smul.addr %s134, 8
          %s136 = scalar_lea.vmem %s0, %s135
          %s137 = smul.u32 15, %s12
          %s138 = ssub.s32 64, %s137
          %p139 = scmp.lt.s32.totalorder %s138, 15
          %s140 = scalar_select %p139, %s138, 15
          %s141 = smul.u32 128, %s140
        $region20: #{tpu_custom_call.1} parent=15 // pred_fallthru
          _
        // Predicated region
        $region21: #{tpu_custom_call.1} parent=15 // pred_check
          %p142 = pneg %p58
        $region22: #{tpu_custom_call.1} parent=15 // pred_check_branch
          %144 = sbr.rel (%p142) target = $region24
        $region23: #{tpu_custom_call.1} parent=15 // pred_region
          %s145 = smul.u32 15, %s12
          %s146 = ssub.s32 64, %s145
          %p147 = scmp.lt.s32.totalorder %s146, 15
          %s148 = scalar_select %p147, %s146, 15
          %s149 = smul.u32 128, %s148
          %p150 = scmp.lt.s32.totalorder %s145, 63
          %s151 = scalar_select %p150, %s145, 63
          %s152 = smul.addr %s151, 8
          %s153 = scalar_lea.vmem %s1, %s152
          %s154 = smul.u32 15, %s12
          %s155 = ssub.s32 64, %s154
          %p156 = scmp.lt.s32.totalorder %s155, 15
          %s157 = scalar_select %p156, %s155, 15
          %s158 = smul.u32 128, %s157
        $region24: #{tpu_custom_call.1} parent=15 // pred_fallthru
          _
      $region16: #{tpu_custom_call.1} parent=5 // pred_fallthru
        _
      %p159 = scmp.le.s32.totalorder 1, %s12
      %p160 = scmp.lt.s32.totalorder %s12, 6
      %p161 = pnand %p159, %p160
      %p162 = pneg %p161
      // Predicated region
      $region25: #{tpu_custom_call.1} parent=5 // pred_check
        _
      $region26: #{tpu_custom_call.1} parent=5 // pred_check_branch
        %164 = sbr.rel (%p161) target = $region28
      $region27: #{tpu_custom_call.1} parent=5 // pred_region
        %s165 = ssub.s32 %s12, 1
        %s166 = smul.u32 15, %s17
        %s167 = ssub.s32 64, %s166
        %p168 = scmp.lt.s32.totalorder %s167, 15
        %s169 = scalar_select %p168, %s167, 15
        %s170 = smul.u32 128, %s169
        %p171 = scmp.lt.s32.totalorder %s166, 63
        %s172 = scalar_select %p171, %s166, 63
        %s173 = smul.addr %s172, 8
        %s174 = scalar_lea.vmem %s0, %s173
        %p175 = pneg %p38
        %p176 = pneg %p35
        %s177 = smul.u32 15, %s17
        %s178 = ssub.s32 64, %s177
        %p179 = scmp.lt.s32.totalorder %s178, 15
        %s180 = scalar_select %p179, %s178, 15
        %s181 = smul.u32 128, %s180
        %p182 = scmp.lt.s32.totalorder %s177, 63
        %s183 = scalar_select %p182, %s177, 63
        %s184 = smul.addr %s183, 8
        %s185 = scalar_lea.vmem %s1, %s184
        %p186 = pneg %p64
        %p187 = pneg %p61
        %p188 = pneg %p85
        %p189 = pneg %p82
        %p190 = pneg %p106
        %p191 = pneg %p103
        %s192 = smul.u32 15, %s17
        %s193 = ssub.s32 64, %s192
        %p194 = scmp.lt.s32.totalorder %s193, 15
        %s195 = scalar_select %p194, %s193, 15
        %s196 = smul.u32 128, %s195
        %p197 = scmp.lt.s32.totalorder %s192, 63
        %s198 = scalar_select %p197, %s192, 63
        %s199 = smul.addr %s198, 8
        %s200 = scalar_lea.vmem %s0, %s199
        %s201 = smul.u32 15, %s17
        %s202 = ssub.s32 64, %s201
        %p203 = scmp.lt.s32.totalorder %s202, 15
        %s204 = scalar_select %p203, %s202, 15
        %s205 = smul.u32 128, %s204
        %s206 = smul.u32 15, %s17
        %s207 = ssub.s32 64, %s206
        %p208 = scmp.lt.s32.totalorder %s207, 15
        %s209 = scalar_select %p208, %s207, 15
        %s210 = smul.u32 128, %s209
        %p211 = scmp.lt.s32.totalorder %s206, 63
        %s212 = scalar_select %p211, %s206, 63
        %s213 = smul.addr %s212, 8
        %s214 = scalar_lea.vmem %s1, %s213
        %s215 = smul.u32 15, %s17
        %s216 = ssub.s32 64, %s215
        %p217 = scmp.lt.s32.totalorder %s216, 15
        %s218 = scalar_select %p217, %s216, 15
        %s219 = smul.u32 128, %s218
        %p220 = scmp.eq.s32.totalorder %s17, 0
        // Predicated region
        $region29: #{tpu_custom_call.1} parent=27 // pred_check
          %p221 = pneg %p220
        $region30: #{tpu_custom_call.1} parent=27 // pred_check_branch
          %223 = sbr.rel (%p221) target = $region32
        $region31: #{tpu_custom_call.1} parent=27 // pred_region
          %vm224 = vcmask 0
          %225 = vst.msk [vmem:[#allocation2] sm:$0x1] %vm224, 0.0
          %226 = vst.msk [vmem:[#allocation4] sm:$0x1] %vm224, 0.0
        $region32: #{tpu_custom_call.1} parent=27 // pred_fallthru
          _
        %v227 = vld [vmem:[%s200] sm:$0xff]
        %v228 = vld [vmem:[%s200 + $0x8] sm:$0xff]
        %v229 = vld [vmem:[%s200 + $0x10] sm:$0xff]
        %v230 = vld [vmem:[%s200 + $0x18] sm:$0xff]
        %v231 = vld [vmem:[%s200 + $0x20] sm:$0xff]
        %v232 = vld [vmem:[%s200 + $0x28] sm:$0xff]
        %v233 = vld [vmem:[%s200 + $0x30] sm:$0xff]
        %v234 = vld [vmem:[%s200 + $0x38] sm:$0xff]
        %v235 = vld [vmem:[%s200 + $0x40] sm:$0xff]
        %v236 = vld [vmem:[%s200 + $0x48] sm:$0xff]
        %v237 = vld [vmem:[%s200 + $0x50] sm:$0xff]
        %v238 = vld [vmem:[%s200 + $0x58] sm:$0xff]
        %v239 = vld [vmem:[%s200 + $0x60] sm:$0xff]
        %v240 = vld [vmem:[%s200 + $0x68] sm:$0xff]
        %v241 = vld [vmem:[%s200 + $0x70] sm:$0xff]
        %v242 = vld [vmem:[%s214] sm:$0xff]
        %v243 = vld [vmem:[%s214 + $0x8] sm:$0xff]
        %v244 = vld [vmem:[%s214 + $0x10] sm:$0xff]
        %v245 = vld [vmem:[%s214 + $0x18] sm:$0xff]
        %v246 = vld [vmem:[%s214 + $0x20] sm:$0xff]
        %v247 = vld [vmem:[%s214 + $0x28] sm:$0xff]
        %v248 = vld [vmem:[%s214 + $0x30] sm:$0xff]
        %v249 = vld [vmem:[%s214 + $0x38] sm:$0xff]
        %v250 = vld [vmem:[%s214 + $0x40] sm:$0xff]
        %v251 = vld [vmem:[%s214 + $0x48] sm:$0xff]
        %v252 = vld [vmem:[%s214 + $0x50] sm:$0xff]
        %v253 = vld [vmem:[%s214 + $0x58] sm:$0xff]
        %v254 = vld [vmem:[%s214 + $0x60] sm:$0xff]
        %v255 = vld [vmem:[%s214 + $0x68] sm:$0xff]
        %v256 = vld [vmem:[%s214 + $0x70] sm:$0xff]
        %v257 = vlaneseq
        %v258 = vshrl.u32 %v257, 7
        %v259 = vadd.s32 %v258, 8
        %v260 = vadd.s32 %v258, 16
        %v261 = vadd.s32 %v258, 24
        %v262 = vadd.s32 %v258, 32
        %v263 = vadd.s32 %v258, 40
        %v264 = vadd.s32 %v258, 48
        %v265 = vadd.s32 %v258, 56
        %v266 = vadd.s32 %v258, 64
        %v267 = vadd.s32 %v258, 72
        %v268 = vadd.s32 %v258, 80
        %v269 = vadd.s32 %v258, 88
        %v270 = vadd.s32 %v258, 96
        %v271 = vadd.s32 %v258, 104
        %v272 = vadd.s32 %v258, 112
        %s273 = smul.u32 %s17, 120
        %v274 = vstv %s273
        %v275 = vadd.s32 %v258, %v274
        %v276 = vadd.s32 %v259, %v274
        %v277 = vadd.s32 %v260, %v274
        %v278 = vadd.s32 %v261, %v274
        %v279 = vadd.s32 %v262, %v274
        %v280 = vadd.s32 %v263, %v274
        %v281 = vadd.s32 %v264, %v274
        %v282 = vadd.s32 %v265, %v274
        %v283 = vadd.s32 %v266, %v274
        %v284 = vadd.s32 %v267, %v274
        %v285 = vadd.s32 %v268, %v274
        %v286 = vadd.s32 %v269, %v274
        %v287 = vadd.s32 %v270, %v274
        %v288 = vadd.s32 %v271, %v274
        %v289 = vadd.s32 %v272, %v274
        %vm290 = vcmp.lt.s32.totalorder %v275, 512
        %vm291 = vcmp.lt.s32.totalorder %v276, 512
        %vm292 = vcmp.lt.s32.totalorder %v277, 512
        %vm293 = vcmp.lt.s32.totalorder %v278, 512
        %vm294 = vcmp.lt.s32.totalorder %v279, 512
        %vm295 = vcmp.lt.s32.totalorder %v280, 512
        %vm296 = vcmp.lt.s32.totalorder %v281, 512
        %vm297 = vcmp.lt.s32.totalorder %v282, 512
        %vm298 = vcmp.lt.s32.totalorder %v283, 512
        %vm299 = vcmp.lt.s32.totalorder %v284, 512
        %vm300 = vcmp.lt.s32.totalorder %v285, 512
        %vm301 = vcmp.lt.s32.totalorder %v286, 512
        %vm302 = vcmp.lt.s32.totalorder %v287, 512
        %vm303 = vcmp.lt.s32.totalorder %v288, 512
        %vm304 = vcmp.lt.s32.totalorder %v289, 512
        %vm305 = vcmp.ne.s32.totalorder %v242, 4294967196
        %vm306 = vcmp.ne.s32.totalorder %v243, 4294967196
        %vm307 = vcmp.ne.s32.totalorder %v244, 4294967196
        %vm308 = vcmp.ne.s32.totalorder %v245, 4294967196
        %vm309 = vcmp.ne.s32.totalorder %v246, 4294967196
        %vm310 = vcmp.ne.s32.totalorder %v247, 4294967196
        %vm311 = vcmp.ne.s32.totalorder %v248, 4294967196
        %vm312 = vcmp.ne.s32.totalorder %v249, 4294967196
        %vm313 = vcmp.ne.s32.totalorder %v250, 4294967196
        %vm314 = vcmp.ne.s32.totalorder %v251, 4294967196
        %vm315 = vcmp.ne.s32.totalorder %v252, 4294967196
        %vm316 = vcmp.ne.s32.totalorder %v253, 4294967196
        %vm317 = vcmp.ne.s32.totalorder %v254, 4294967196
        %vm318 = vcmp.ne.s32.totalorder %v255, 4294967196
        %vm319 = vcmp.ne.s32.totalorder %v256, 4294967196
        %vm320 = vmand %vm290, %vm305
        %vm321 = vmand %vm291, %vm306
        %vm322 = vmand %vm292, %vm307
        %vm323 = vmand %vm293, %vm308
        %vm324 = vmand %vm294, %vm309
        %vm325 = vmand %vm295, %vm310
        %vm326 = vmand %vm296, %vm311
        %vm327 = vmand %vm297, %vm312
        %vm328 = vmand %vm298, %vm313
        %vm329 = vmand %vm299, %vm314
        %vm330 = vmand %vm300, %vm315
        %vm331 = vmand %vm301, %vm316
        %vm332 = vmand %vm302, %vm317
        %vm333 = vmand %vm303, %vm318
        %vm334 = vmand %vm304, %vm319
        %vm335 = vcmask 261120
        %v336 = vsel %vm335, %v227, -inf
        %337 = vmax.xlane.f32.xlu0 %v336
        %v338 = vpop.xlane.xlu0 %337
        %v339 = vsel %vm335, %v228, -inf
        %340 = vmax.xlane.f32.xlu0 %v339
        %v341 = vpop.xlane.xlu0 %340
        %v342 = vsel %vm335, %v229, -inf
        %343 = vmax.xlane.f32.xlu0 %v342
        %v344 = vpop.xlane.xlu0 %343
        %v345 = vsel %vm335, %v230, -inf
        %346 = vmax.xlane.f32.xlu0 %v345
        %v347 = vpop.xlane.xlu0 %346
        %v348 = vsel %vm335, %v231, -inf
        %349 = vmax.xlane.f32.xlu0 %v348
        %v350 = vpop.xlane.xlu0 %349
        %v351 = vsel %vm335, %v232, -inf
        %352 = vmax.xlane.f32.xlu0 %v351
        %v353 = vpop.xlane.xlu0 %352
        %v354 = vsel %vm335, %v233, -inf
        %355 = vmax.xlane.f32.xlu0 %v354
        %v356 = vpop.xlane.xlu0 %355
        %v357 = vsel %vm335, %v234, -inf
        %358 = vmax.xlane.f32.xlu0 %v357
        %v359 = vpop.xlane.xlu0 %358
        %v360 = vsel %vm335, %v235, -inf
        %361 = vmax.xlane.f32.xlu0 %v360
        %v362 = vpop.xlane.xlu0 %361
        %v363 = vsel %vm335, %v236, -inf
        %364 = vmax.xlane.f32.xlu0 %v363
        %v365 = vpop.xlane.xlu0 %364
        %v366 = vsel %vm335, %v237, -inf
        %367 = vmax.xlane.f32.xlu0 %v366
        %v368 = vpop.xlane.xlu0 %367
        %v369 = vsel %vm335, %v238, -inf
        %370 = vmax.xlane.f32.xlu0 %v369
        %v371 = vpop.xlane.xlu0 %370
        %v372 = vsel %vm335, %v239, -inf
        %373 = vmax.xlane.f32.xlu0 %v372
        %v374 = vpop.xlane.xlu0 %373
        %v375 = vsel %vm335, %v240, -inf
        %376 = vmax.xlane.f32.xlu0 %v375
        %v377 = vpop.xlane.xlu0 %376
        %v378 = vsel %vm335, %v241, -inf
        %379 = vmax.xlane.f32.xlu0 %v378
        %v380 = vpop.xlane.xlu0 %379
        %v381 = vsub.f32 %v227, %v338
        %v382 = vsub.f32 %v228, %v341
        %v383 = vsub.f32 %v229, %v344
        %v384 = vsub.f32 %v230, %v347
        %v385 = vsub.f32 %v231, %v350
        %v386 = vsub.f32 %v232, %v353
        %v387 = vsub.f32 %v233, %v356
        %v388 = vsub.f32 %v234, %v359
        %v389 = vsub.f32 %v235, %v362
        %v390 = vsub.f32 %v236, %v365
        %v391 = vsub.f32 %v237, %v368
        %v392 = vsub.f32 %v238, %v371
        %v393 = vsub.f32 %v239, %v374
        %v394 = vsub.f32 %v240, %v377
        %v395 = vsub.f32 %v241, %v380
        %v396 = vmul.f32 %v381, 1.442695
        %v397 = vpow.pop %v396
        %v398 = vmul.f32 %v382, 1.442695
        %v399 = vpow.pop %v398
        %v400 = vmul.f32 %v383, 1.442695
        %v401 = vpow.pop %v400
        %v402 = vmul.f32 %v384, 1.442695
        %v403 = vpow.pop %v402
        %v404 = vmul.f32 %v385, 1.442695
        %v405 = vpow.pop %v404
        %v406 = vmul.f32 %v386, 1.442695
        %v407 = vpow.pop %v406
        %v408 = vmul.f32 %v387, 1.442695
        %v409 = vpow.pop %v408
        %v410 = vmul.f32 %v388, 1.442695
        %v411 = vpow.pop %v410
        %v412 = vmul.f32 %v389, 1.442695
        %v413 = vpow.pop %v412
        %v414 = vmul.f32 %v390, 1.442695
        %v415 = vpow.pop %v414
        %v416 = vmul.f32 %v391, 1.442695
        %v417 = vpow.pop %v416
        %v418 = vmul.f32 %v392, 1.442695
        %v419 = vpow.pop %v418
        %v420 = vmul.f32 %v393, 1.442695
        %v421 = vpow.pop %v420
        %v422 = vmul.f32 %v394, 1.442695
        %v423 = vpow.pop %v422
        %v424 = vmul.f32 %v395, 1.442695
        %v425 = vpow.pop %v424
        %v426 = vsel %vm335, %v397, 0.0
        %427 = vadd.xlane.f32.xlu0 %v426
        %v428 = vpop.xlane.xlu0 %427
        %v429 = vsel %vm335, %v399, 0.0
        %430 = vadd.xlane.f32.xlu0 %v429
        %v431 = vpop.xlane.xlu0 %430
        %v432 = vsel %vm335, %v401, 0.0
        %433 = vadd.xlane.f32.xlu0 %v432
        %v434 = vpop.xlane.xlu0 %433
        %v435 = vsel %vm335, %v403, 0.0
        %436 = vadd.xlane.f32.xlu0 %v435
        %v437 = vpop.xlane.xlu0 %436
        %v438 = vsel %vm335, %v405, 0.0
        %439 = vadd.xlane.f32.xlu0 %v438
        %v440 = vpop.xlane.xlu0 %439
        %v441 = vsel %vm335, %v407, 0.0
        %442 = vadd.xlane.f32.xlu0 %v441
        %v443 = vpop.xlane.xlu0 %442
        %v444 = vsel %vm335, %v409, 0.0
        %445 = vadd.xlane.f32.xlu0 %v444
        %v446 = vpop.xlane.xlu0 %445
        %v447 = vsel %vm335, %v411, 0.0
        %448 = vadd.xlane.f32.xlu0 %v447
        %v449 = vpop.xlane.xlu0 %448
        %v450 = vsel %vm335, %v413, 0.0
        %451 = vadd.xlane.f32.xlu0 %v450
        %v452 = vpop.xlane.xlu0 %451
        %v453 = vsel %vm335, %v415, 0.0
        %454 = vadd.xlane.f32.xlu0 %v453
        %v455 = vpop.xlane.xlu0 %454
        %v456 = vsel %vm335, %v417, 0.0
        %457 = vadd.xlane.f32.xlu0 %v456
        %v458 = vpop.xlane.xlu0 %457
        %v459 = vsel %vm335, %v419, 0.0
        %460 = vadd.xlane.f32.xlu0 %v459
        %v461 = vpop.xlane.xlu0 %460
        %v462 = vsel %vm335, %v421, 0.0
        %463 = vadd.xlane.f32.xlu0 %v462
        %v464 = vpop.xlane.xlu0 %463
        %v465 = vsel %vm335, %v423, 0.0
        %466 = vadd.xlane.f32.xlu0 %v465
        %v467 = vpop.xlane.xlu0 %466
        %v468 = vsel %vm335, %v425, 0.0
        %469 = vadd.xlane.f32.xlu0 %v468
        %v470 = vpop.xlane.xlu0 %469
        %v471 = vlog2.pop %v428
        %v472 = vmul.f32 %v471, 0.6931472
        %v473 = vlog2.pop %v431
        %v474 = vmul.f32 %v473, 0.6931472
        %v475 = vlog2.pop %v434
        %v476 = vmul.f32 %v475, 0.6931472
        %v477 = vlog2.pop %v437
        %v478 = vmul.f32 %v477, 0.6931472
        %v479 = vlog2.pop %v440
        %v480 = vmul.f32 %v479, 0.6931472
        %v481 = vlog2.pop %v443
        %v482 = vmul.f32 %v481, 0.6931472
        %v483 = vlog2.pop %v446
        %v484 = vmul.f32 %v483, 0.6931472
        %v485 = vlog2.pop %v449
        %v486 = vmul.f32 %v485, 0.6931472
        %v487 = vlog2.pop %v452
        %v488 = vmul.f32 %v487, 0.6931472
        %v489 = vlog2.pop %v455
        %v490 = vmul.f32 %v489, 0.6931472
        %v491 = vlog2.pop %v458
        %v492 = vmul.f32 %v491, 0.6931472
        %v493 = vlog2.pop %v461
        %v494 = vmul.f32 %v493, 0.6931472
        %v495 = vlog2.pop %v464
        %v496 = vmul.f32 %v495, 0.6931472
        %v497 = vlog2.pop %v467
        %v498 = vmul.f32 %v497, 0.6931472
        %v499 = vlog2.pop %v470
        %v500 = vmul.f32 %v499, 0.6931472
        %v501 = vlaneseq
        %v502 = vand.u32 %v501, 127
        %503 = vset.pattern.permute.xlu0 0
        %504 = vperm.xlu0 %503, %v242
        %v505 = vpop.permute.xlu0 %504
        %506 = vset.pattern.permute.xlu0 0
        %507 = vperm.xlu0 %506, %v243
        %v508 = vpop.permute.xlu0 %507
        %509 = vset.pattern.permute.xlu0 0
        %510 = vperm.xlu0 %509, %v244
        %v511 = vpop.permute.xlu0 %510
        %512 = vset.pattern.permute.xlu0 0
        %513 = vperm.xlu0 %512, %v245
        %v514 = vpop.permute.xlu0 %513
        %515 = vset.pattern.permute.xlu0 0
        %516 = vperm.xlu0 %515, %v246
        %v517 = vpop.permute.xlu0 %516
        %518 = vset.pattern.permute.xlu0 0
        %519 = vperm.xlu0 %518, %v247
        %v520 = vpop.permute.xlu0 %519
        %521 = vset.pattern.permute.xlu0 0
        %522 = vperm.xlu0 %521, %v248
        %v523 = vpop.permute.xlu0 %522
        %524 = vset.pattern.permute.xlu0 0
        %525 = vperm.xlu0 %524, %v249
        %v526 = vpop.permute.xlu0 %525
        %527 = vset.pattern.permute.xlu0 0
        %528 = vperm.xlu0 %527, %v250
        %v529 = vpop.permute.xlu0 %528
        %530 = vset.pattern.permute.xlu0 0
        %531 = vperm.xlu0 %530, %v251
        %v532 = vpop.permute.xlu0 %531
        %533 = vset.pattern.permute.xlu0 0
        %534 = vperm.xlu0 %533, %v252
        %v535 = vpop.permute.xlu0 %534
        %536 = vset.pattern.permute.xlu0 0
        %537 = vperm.xlu0 %536, %v253
        %v538 = vpop.permute.xlu0 %537
        %539 = vset.pattern.permute.xlu0 0
        %540 = vperm.xlu0 %539, %v254
        %v541 = vpop.permute.xlu0 %540
        %542 = vset.pattern.permute.xlu0 0
        %543 = vperm.xlu0 %542, %v255
        %v544 = vpop.permute.xlu0 %543
        %545 = vset.pattern.permute.xlu0 0
        %546 = vperm.xlu0 %545, %v256
        %v547 = vpop.permute.xlu0 %546
        %vm548 = vcmp.eq.s32.totalorder %v502, %v505
        %vm549 = vcmp.eq.s32.totalorder %v502, %v508
        %vm550 = vcmp.eq.s32.totalorder %v502, %v511
        %vm551 = vcmp.eq.s32.totalorder %v502, %v514
        %vm552 = vcmp.eq.s32.totalorder %v502, %v517
        %vm553 = vcmp.eq.s32.totalorder %v502, %v520
        %vm554 = vcmp.eq.s32.totalorder %v502, %v523
        %vm555 = vcmp.eq.s32.totalorder %v502, %v526
        %vm556 = vcmp.eq.s32.totalorder %v502, %v529
        %vm557 = vcmp.eq.s32.totalorder %v502, %v532
        %vm558 = vcmp.eq.s32.totalorder %v502, %v535
        %vm559 = vcmp.eq.s32.totalorder %v502, %v538
        %vm560 = vcmp.eq.s32.totalorder %v502, %v541
        %vm561 = vcmp.eq.s32.totalorder %v502, %v544
        %vm562 = vcmp.eq.s32.totalorder %v502, %v547
        %v563 = vsel %vm548, 1, 0
        %v564 = vsel %vm549, 1, 0
        %v565 = vsel %vm550, 1, 0
        %v566 = vsel %vm551, 1, 0
        %v567 = vsel %vm552, 1, 0
        %v568 = vsel %vm553, 1, 0
        %v569 = vsel %vm554, 1, 0
        %v570 = vsel %vm555, 1, 0
        %v571 = vsel %vm556, 1, 0
        %v572 = vsel %vm557, 1, 0
        %v573 = vsel %vm558, 1, 0
        %v574 = vsel %vm559, 1, 0
        %v575 = vsel %vm560, 1, 0
        %v576 = vsel %vm561, 1, 0
        %v577 = vsel %vm562, 1, 0
        %v578 = vcvt.s32.f32 %v563
        %v579 = vcvt.s32.f32 %v564
        %v580 = vcvt.s32.f32 %v565
        %v581 = vcvt.s32.f32 %v566
        %v582 = vcvt.s32.f32 %v567
        %v583 = vcvt.s32.f32 %v568
        %v584 = vcvt.s32.f32 %v569
        %v585 = vcvt.s32.f32 %v570
        %v586 = vcvt.s32.f32 %v571
        %v587 = vcvt.s32.f32 %v572
        %v588 = vcvt.s32.f32 %v573
        %v589 = vcvt.s32.f32 %v574
        %v590 = vcvt.s32.f32 %v575
        %v591 = vcvt.s32.f32 %v576
        %v592 = vcvt.s32.f32 %v577
        %v593 = vmul.f32 %v381, %v578
        %v594 = vmul.f32 %v382, %v579
        %v595 = vmul.f32 %v383, %v580
        %v596 = vmul.f32 %v384, %v581
        %v597 = vmul.f32 %v385, %v582
        %v598 = vmul.f32 %v386, %v583
        %v599 = vmul.f32 %v387, %v584
        %v600 = vmul.f32 %v388, %v585
        %v601 = vmul.f32 %v389, %v586
        %v602 = vmul.f32 %v390, %v587
        %v603 = vmul.f32 %v391, %v588
        %v604 = vmul.f32 %v392, %v589
        %v605 = vmul.f32 %v393, %v590
        %v606 = vmul.f32 %v394, %v591
        %v607 = vmul.f32 %v395, %v592
        %v608 = vsel %vm335, %v593, 0.0
        %609 = vadd.xlane.f32.xlu0 %v608
        %v610 = vpop.xlane.xlu0 %609
        %v611 = vsel %vm335, %v594, 0.0
        %612 = vadd.xlane.f32.xlu0 %v611
        %v613 = vpop.xlane.xlu0 %612
        %v614 = vsel %vm335, %v595, 0.0
        %615 = vadd.xlane.f32.xlu0 %v614
        %v616 = vpop.xlane.xlu0 %615
        %v617 = vsel %vm335, %v596, 0.0
        %618 = vadd.xlane.f32.xlu0 %v617
        %v619 = vpop.xlane.xlu0 %618
        %v620 = vsel %vm335, %v597, 0.0
        %621 = vadd.xlane.f32.xlu0 %v620
        %v622 = vpop.xlane.xlu0 %621
        %v623 = vsel %vm335, %v598, 0.0
        %624 = vadd.xlane.f32.xlu0 %v623
        %v625 = vpop.xlane.xlu0 %624
        %v626 = vsel %vm335, %v599, 0.0
        %627 = vadd.xlane.f32.xlu0 %v626
        %v628 = vpop.xlane.xlu0 %627
        %v629 = vsel %vm335, %v600, 0.0
        %630 = vadd.xlane.f32.xlu0 %v629
        %v631 = vpop.xlane.xlu0 %630
        %v632 = vsel %vm335, %v601, 0.0
        %633 = vadd.xlane.f32.xlu0 %v632
        %v634 = vpop.xlane.xlu0 %633
        %v635 = vsel %vm335, %v602, 0.0
        %636 = vadd.xlane.f32.xlu0 %v635
        %v637 = vpop.xlane.xlu0 %636
        %v638 = vsel %vm335, %v603, 0.0
        %639 = vadd.xlane.f32.xlu0 %v638
        %v640 = vpop.xlane.xlu0 %639
        %v641 = vsel %vm335, %v604, 0.0
        %642 = vadd.xlane.f32.xlu0 %v641
        %v643 = vpop.xlane.xlu0 %642
        %v644 = vsel %vm335, %v605, 0.0
        %645 = vadd.xlane.f32.xlu0 %v644
        %v646 = vpop.xlane.xlu0 %645
        %v647 = vsel %vm335, %v606, 0.0
        %648 = vadd.xlane.f32.xlu0 %v647
        %v649 = vpop.xlane.xlu0 %648
        %v650 = vsel %vm335, %v607, 0.0
        %651 = vadd.xlane.f32.xlu0 %v650
        %v652 = vpop.xlane.xlu0 %651
        %v653 = vsel %vm335, %v381, 0.0
        %654 = vadd.xlane.f32.xlu0 %v653
        %v655 = vpop.xlane.xlu0 %654
        %v656 = vsel %vm335, %v382, 0.0
        %657 = vadd.xlane.f32.xlu0 %v656
        %v658 = vpop.xlane.xlu0 %657
        %v659 = vsel %vm335, %v383, 0.0
        %660 = vadd.xlane.f32.xlu0 %v659
        %v661 = vpop.xlane.xlu0 %660
        %v662 = vsel %vm335, %v384, 0.0
        %663 = vadd.xlane.f32.xlu0 %v662
        %v664 = vpop.xlane.xlu0 %663
        %v665 = vsel %vm335, %v385, 0.0
        %666 = vadd.xlane.f32.xlu0 %v665
        %v667 = vpop.xlane.xlu0 %666
        %v668 = vsel %vm335, %v386, 0.0
        %669 = vadd.xlane.f32.xlu0 %v668
        %v670 = vpop.xlane.xlu0 %669
        %v671 = vsel %vm335, %v387, 0.0
        %672 = vadd.xlane.f32.xlu0 %v671
        %v673 = vpop.xlane.xlu0 %672
        %v674 = vsel %vm335, %v388, 0.0
        %675 = vadd.xlane.f32.xlu0 %v674
        %v676 = vpop.xlane.xlu0 %675
        %v677 = vsel %vm335, %v389, 0.0
        %678 = vadd.xlane.f32.xlu0 %v677
        %v679 = vpop.xlane.xlu0 %678
        %v680 = vsel %vm335, %v390, 0.0
        %681 = vadd.xlane.f32.xlu0 %v680
        %v682 = vpop.xlane.xlu0 %681
        %v683 = vsel %vm335, %v391, 0.0
        %684 = vadd.xlane.f32.xlu0 %v683
        %v685 = vpop.xlane.xlu0 %684
        %v686 = vsel %vm335, %v392, 0.0
        %687 = vadd.xlane.f32.xlu0 %v686
        %v688 = vpop.xlane.xlu0 %687
        %v689 = vsel %vm335, %v393, 0.0
        %690 = vadd.xlane.f32.xlu0 %v689
        %v691 = vpop.xlane.xlu0 %690
        %v692 = vsel %vm335, %v394, 0.0
        %693 = vadd.xlane.f32.xlu0 %v692
        %v694 = vpop.xlane.xlu0 %693
        %v695 = vsel %vm335, %v395, 0.0
        %696 = vadd.xlane.f32.xlu0 %v695
        %v697 = vpop.xlane.xlu0 %696
        %v698 = vsub.f32 %v610, %v472
        %v699 = vsub.f32 %v613, %v474
        %v700 = vsub.f32 %v616, %v476
        %v701 = vsub.f32 %v619, %v478
        %v702 = vsub.f32 %v622, %v480
        %v703 = vsub.f32 %v625, %v482
        %v704 = vsub.f32 %v628, %v484
        %v705 = vsub.f32 %v631, %v486
        %v706 = vsub.f32 %v634, %v488
        %v707 = vsub.f32 %v637, %v490
        %v708 = vsub.f32 %v640, %v492
        %v709 = vsub.f32 %v643, %v494
        %v710 = vsub.f32 %v646, %v496
        %v711 = vsub.f32 %v649, %v498
        %v712 = vsub.f32 %v652, %v500
        %v713 = vmul.f32 %v472, 32.0
        %v714 = vmul.f32 %v474, 32.0
        %v715 = vmul.f32 %v476, 32.0
        %v716 = vmul.f32 %v478, 32.0
        %v717 = vmul.f32 %v480, 32.0
        %v718 = vmul.f32 %v482, 32.0
        %v719 = vmul.f32 %v484, 32.0
        %v720 = vmul.f32 %v486, 32.0
        %v721 = vmul.f32 %v488, 32.0
        %v722 = vmul.f32 %v490, 32.0
        %v723 = vmul.f32 %v492, 32.0
        %v724 = vmul.f32 %v494, 32.0
        %v725 = vmul.f32 %v496, 32.0
        %v726 = vmul.f32 %v498, 32.0
        %v727 = vmul.f32 %v500, 32.0
        %v728 = vsub.f32 %v655, %v713
        %v729 = vsub.f32 %v658, %v714
        %v730 = vsub.f32 %v661, %v715
        %v731 = vsub.f32 %v664, %v716
        %v732 = vsub.f32 %v667, %v717
        %v733 = vsub.f32 %v670, %v718
        %v734 = vsub.f32 %v673, %v719
        %v735 = vsub.f32 %v676, %v720
        %v736 = vsub.f32 %v679, %v721
        %v737 = vsub.f32 %v682, %v722
        %v738 = vsub.f32 %v685, %v723
        %v739 = vsub.f32 %v688, %v724
        %v740 = vsub.f32 %v691, %v725
        %v741 = vsub.f32 %v694, %v726
        %v742 = vsub.f32 %v697, %v727
        %v743 = vmul.f32 %v698, 0.896875
        %v744 = vmul.f32 %v699, 0.896875
        %v745 = vmul.f32 %v700, 0.896875
        %v746 = vmul.f32 %v701, 0.896875
        %v747 = vmul.f32 %v702, 0.896875
        %v748 = vmul.f32 %v703, 0.896875
        %v749 = vmul.f32 %v704, 0.896875
        %v750 = vmul.f32 %v705, 0.896875
        %v751 = vmul.f32 %v706, 0.896875
        %v752 = vmul.f32 %v707, 0.896875
        %v753 = vmul.f32 %v708, 0.896875
        %v754 = vmul.f32 %v709, 0.896875
        %v755 = vmul.f32 %v710, 0.896875
        %v756 = vmul.f32 %v711, 0.896875
        %v757 = vmul.f32 %v712, 0.896875
        %v758 = vmul.f32 %v728, 0.003125
        %v759 = vmul.f32 %v729, 0.003125
        %v760 = vmul.f32 %v730, 0.003125
        %v761 = vmul.f32 %v731, 0.003125
        %v762 = vmul.f32 %v732, 0.003125
        %v763 = vmul.f32 %v733, 0.003125
        %v764 = vmul.f32 %v734, 0.003125
        %v765 = vmul.f32 %v735, 0.003125
        %v766 = vmul.f32 %v736, 0.003125
        %v767 = vmul.f32 %v737, 0.003125
        %v768 = vmul.f32 %v738, 0.003125
        %v769 = vmul.f32 %v739, 0.003125
        %v770 = vmul.f32 %v740, 0.003125
        %v771 = vmul.f32 %v741, 0.003125
        %v772 = vmul.f32 %v742, 0.003125
        %v773 = vadd.f32 %v743, %v758
        %v774 = vadd.f32 %v744, %v759
        %v775 = vadd.f32 %v745, %v760
        %v776 = vadd.f32 %v746, %v761
        %v777 = vadd.f32 %v747, %v762
        %v778 = vadd.f32 %v748, %v763
        %v779 = vadd.f32 %v749, %v764
        %v780 = vadd.f32 %v750, %v765
        %v781 = vadd.f32 %v751, %v766
        %v782 = vadd.f32 %v752, %v767
        %v783 = vadd.f32 %v753, %v768
        %v784 = vadd.f32 %v754, %v769
        %v785 = vadd.f32 %v755, %v770
        %v786 = vadd.f32 %v756, %v771
        %v787 = vadd.f32 %v757, %v772
        %v788 = vsub.f32 0.0, %v773
        %v789 = vsub.f32 0.0, %v774
        %v790 = vsub.f32 0.0, %v775
        %v791 = vsub.f32 0.0, %v776
        %v792 = vsub.f32 0.0, %v777
        %v793 = vsub.f32 0.0, %v778
        %v794 = vsub.f32 0.0, %v779
        %v795 = vsub.f32 0.0, %v780
        %v796 = vsub.f32 0.0, %v781
        %v797 = vsub.f32 0.0, %v782
        %v798 = vsub.f32 0.0, %v783
        %v799 = vsub.f32 0.0, %v784
        %v800 = vsub.f32 0.0, %v785
        %v801 = vsub.f32 0.0, %v786
        %v802 = vsub.f32 0.0, %v787
        %v803 = vsel %vm320, 1, 0
        %v804 = vsel %vm321, 1, 0
        %v805 = vsel %vm322, 1, 0
        %v806 = vsel %vm323, 1, 0
        %v807 = vsel %vm324, 1, 0
        %v808 = vsel %vm325, 1, 0
        %v809 = vsel %vm326, 1, 0
        %v810 = vsel %vm327, 1, 0
        %v811 = vsel %vm328, 1, 0
        %v812 = vsel %vm329, 1, 0
        %v813 = vsel %vm330, 1, 0
        %v814 = vsel %vm331, 1, 0
        %v815 = vsel %vm332, 1, 0
        %v816 = vsel %vm333, 1, 0
        %v817 = vsel %vm334, 1, 0
        %v818 = vcvt.s32.f32 %v803
        %v819 = vcvt.s32.f32 %v804
        %v820 = vcvt.s32.f32 %v805
        %v821 = vcvt.s32.f32 %v806
        %v822 = vcvt.s32.f32 %v807
        %v823 = vcvt.s32.f32 %v808
        %v824 = vcvt.s32.f32 %v809
        %v825 = vcvt.s32.f32 %v810
        %v826 = vcvt.s32.f32 %v811
        %v827 = vcvt.s32.f32 %v812
        %v828 = vcvt.s32.f32 %v813
        %v829 = vcvt.s32.f32 %v814
        %v830 = vcvt.s32.f32 %v815
        %v831 = vcvt.s32.f32 %v816
        %v832 = vcvt.s32.f32 %v817
        %v833 = vld [vmem:[#allocation2] sm:$0x1]
        %v834 = vsel %vm320, %v788, 0.0
        %v835 = vsel %vm321, %v789, 0.0
        %v836 = vsel %vm322, %v790, 0.0
        %v837 = vsel %vm323, %v791, 0.0
        %v838 = vsel %vm324, %v792, 0.0
        %v839 = vsel %vm325, %v793, 0.0
        %v840 = vsel %vm326, %v794, 0.0
        %v841 = vsel %vm327, %v795, 0.0
        %v842 = vsel %vm328, %v796, 0.0
        %v843 = vsel %vm329, %v797, 0.0
        %v844 = vsel %vm330, %v798, 0.0
        %v845 = vsel %vm331, %v799, 0.0
        %v846 = vsel %vm332, %v800, 0.0
        %v847 = vsel %vm333, %v801, 0.0
        %v848 = vsel %vm334, %v802, 0.0
        %vm849 = vcmask 7168
        %v850 = vsel %vm849, %v834, 0.0
        %v851 = vsel %vm849, %v835, 0.0
        %v852 = vadd.f32 %v850, %v851
        %v853 = vsel %vm849, %v836, 0.0
        %v854 = vadd.f32 %v852, %v853
        %v855 = vsel %vm849, %v837, 0.0
        %v856 = vadd.f32 %v854, %v855
        %v857 = vsel %vm849, %v838, 0.0
        %v858 = vadd.f32 %v856, %v857
        %v859 = vsel %vm849, %v839, 0.0
        %v860 = vadd.f32 %v858, %v859
        %v861 = vsel %vm849, %v840, 0.0
        %v862 = vadd.f32 %v860, %v861
        %v863 = vsel %vm849, %v841, 0.0
        %v864 = vadd.f32 %v862, %v863
        %v865 = vsel %vm849, %v842, 0.0
        %v866 = vadd.f32 %v864, %v865
        %v867 = vsel %vm849, %v843, 0.0
        %v868 = vadd.f32 %v866, %v867
        %v869 = vsel %vm849, %v844, 0.0
        %v870 = vadd.f32 %v868, %v869
        %v871 = vsel %vm849, %v845, 0.0
        %v872 = vadd.f32 %v870, %v871
        %v873 = vsel %vm849, %v846, 0.0
        %v874 = vadd.f32 %v872, %v873
        %v875 = vsel %vm849, %v847, 0.0
        %v876 = vadd.f32 %v874, %v875
        %v877 = vsel %vm849, %v848, 0.0
        %v878 = vadd.f32 %v876, %v877
        %879 = vadd.xlane.f32.xlu0 %v878
        %v880 = vpop.xlane.xlu0 %879
        %v881 = vrot.slane %v880, 4
        %v882 = vadd.f32 %v880, %v881
        %v883 = vrot.slane %v882, 2
        %v884 = vadd.f32 %v882, %v883
        %v885 = vrot.slane %v884, 1
        %v886 = vadd.f32 %v884, %v885
        %s887 = vtos %v886
        %v888 = vstv %s887
        %v889 = vadd.f32 %v833, %v888
        %vm890 = vcmask 0
        %891 = vst.msk [vmem:[#allocation2] sm:$0x1] %vm890, %v889
        %v892 = vld [vmem:[#allocation4] sm:$0x1]
        %v893 = vsel %vm849, %v818, 0.0
        %v894 = vsel %vm849, %v819, 0.0
        %v895 = vadd.f32 %v893, %v894
        %v896 = vsel %vm849, %v820, 0.0
        %v897 = vadd.f32 %v895, %v896
        %v898 = vsel %vm849, %v821, 0.0
        %v899 = vadd.f32 %v897, %v898
        %v900 = vsel %vm849, %v822, 0.0
        %v901 = vadd.f32 %v899, %v900
        %v902 = vsel %vm849, %v823, 0.0
        %v903 = vadd.f32 %v901, %v902
        %v904 = vsel %vm849, %v824, 0.0
        %v905 = vadd.f32 %v903, %v904
        %v906 = vsel %vm849, %v825, 0.0
        %v907 = vadd.f32 %v905, %v906
        %v908 = vsel %vm849, %v826, 0.0
        %v909 = vadd.f32 %v907, %v908
        %v910 = vsel %vm849, %v827, 0.0
        %v911 = vadd.f32 %v909, %v910
        %v912 = vsel %vm849, %v828, 0.0
        %v913 = vadd.f32 %v911, %v912
        %v914 = vsel %vm849, %v829, 0.0
        %v915 = vadd.f32 %v913, %v914
        %v916 = vsel %vm849, %v830, 0.0
        %v917 = vadd.f32 %v915, %v916
        %v918 = vsel %vm849, %v831, 0.0
        %v919 = vadd.f32 %v917, %v918
        %v920 = vsel %vm849, %v832, 0.0
        %v921 = vadd.f32 %v919, %v920
        %922 = vadd.xlane.f32.xlu0 %v921
        %v923 = vpop.xlane.xlu0 %922
        %v924 = vrot.slane %v923, 4
        %v925 = vadd.f32 %v923, %v924
        %v926 = vrot.slane %v925, 2
        %v927 = vadd.f32 %v925, %v926
        %v928 = vrot.slane %v927, 1
        %v929 = vadd.f32 %v927, %v928
        %s930 = vtos %v929
        %v931 = vstv %s930
        %v932 = vadd.f32 %v892, %v931
        %933 = vst.msk [vmem:[#allocation4] sm:$0x1] %vm890, %v932
        // Predicated region
        $region33: #{tpu_custom_call.1} parent=27 // pred_check
          %p934 = pneg %p82
        $region34: #{tpu_custom_call.1} parent=27 // pred_check_branch
          %936 = sbr.rel (%p934) target = $region36
        $region35: #{tpu_custom_call.1} parent=27 // pred_region
          %s938 = ssub.s32 16, 16
          %939 = vsyncadd [#allocation3], %s938
          %s941 = sshll.u32 [#allocation2], 4
          %s942 = int_to_ptr.vmem [resolvable:$true] %s941
          %944 = dma.vmem_to_hbm [thread:$0]  %s942, 16, %s2, [#allocation3]
        $region36: #{tpu_custom_call.1} parent=27 // pred_fallthru
          _
        // Predicated region
        $region37: #{tpu_custom_call.1} parent=27 // pred_check
          %p945 = pneg %p103
        $region38: #{tpu_custom_call.1} parent=27 // pred_check_branch
          %947 = sbr.rel (%p945) target = $region40
        $region39: #{tpu_custom_call.1} parent=27 // pred_region
          %s949 = ssub.s32 16, 16
          %950 = vsyncadd [#allocation5], %s949
          %s952 = sshll.u32 [#allocation4], 4
          %s953 = int_to_ptr.vmem [resolvable:$true] %s952
          %955 = dma.vmem_to_hbm [thread:$0]  %s953, 16, %s3, [#allocation5]
        $region40: #{tpu_custom_call.1} parent=27 // pred_fallthru
          _
        // Predicated region
        $region41: #{tpu_custom_call.1} parent=27 // pred_check
          %p956 = pneg %p82
        $region42: #{tpu_custom_call.1} parent=27 // pred_check_branch
          %958 = sbr.rel (%p956) target = $region44
        $region43: #{tpu_custom_call.1} parent=27 // pred_region
          %959 = dma.done [#allocation3], 16
        $region44: #{tpu_custom_call.1} parent=27 // pred_fallthru
          _
        // Predicated region
        $region45: #{tpu_custom_call.1} parent=27 // pred_check
          %p960 = pneg %p103
        $region46: #{tpu_custom_call.1} parent=27 // pred_check_branch
          %962 = sbr.rel (%p960) target = $region48
        $region47: #{tpu_custom_call.1} parent=27 // pred_region
          %963 = dma.done [#allocation5], 16
        $region48: #{tpu_custom_call.1} parent=27 // pred_fallthru
          _
      $region28: #{tpu_custom_call.1} parent=5 // pred_fallthru
        _
      %p964 = scmp.le.s32.totalorder 2, %s12
      // Predicated region
      $region49: #{tpu_custom_call.1} parent=5 // pred_check
        %p965 = pneg %p964
      $region50: #{tpu_custom_call.1} parent=5 // pred_check_branch
        %967 = sbr.rel (%p965) target = $region52
      $region51: #{tpu_custom_call.1} parent=5 // pred_region
        %s968 = ssub.s32 %s12, 2
      $region52: #{tpu_custom_call.1} parent=5 // pred_fallthru
        _
    $region6: #{tpu_custom_call.1} parent=1 // loop_footer
      %s16 = sadd.s32 1, %s12
    $region7: #{tpu_custom_call.1} parent=1 // loop_footer_branch
      %11 = sbr.rel target = $region3
    $region8: #{tpu_custom_call.1} parent=1 // loop_exit
      _
    %969 = vsyncpa [#allocation3], 1
    %s970 = scalar_lea.sflag [#allocation3], 1
    %971 = vsyncpa %s970, 1
    %972 = vsyncpa [#allocation5], 1

</llo_original>
